<compile_context>
chip_gen: v7x
topology: tpu7x:2x2x1
jax: 0.10.0
libtpu: 0.0.40
codegen_flags: <defaults>
</compile_context>

<pallas_src>
import math
import functools

import jax
import jax.numpy as jnp
from jax import lax
from jax.experimental import pallas as pl
from jax.experimental.pallas import tpu as pltpu


# ----------------------------------------------------------------------------
# Kernel 1: streamed exact top-1 inner-product search over the memory bank.
# ----------------------------------------------------------------------------
def knn_search_kernel(qp_ref, bank_ref, idx_ref, best_s, best_idx):
    """grid = (bsz, n_bank // TN); bank axis last ("arbitrary").

    qp_ref   : (1, L, D)   bf16  projected queries (constant along bank axis)
    bank_ref : (1, TN, D)  bf16  current bank tile
    idx_ref  : (1, L, 1)   int32 output: global argmax bank-row index per query
    best_s   : (L, 1)      f32   scratch: running best inner-product score
    best_idx : (L, 1)      int32 scratch: running best global row index
    """
    f32 = jnp.float32
    _, L, _D = qp_ref.shape
    TN = bank_ref.shape[1]

    n = pl.program_id(1)
    n_last = pl.num_programs(1) - 1

    @pl.when(n == 0)
    def _init():
        best_s[...] = jnp.full((L, 1), -jnp.inf, f32)
        best_idx[...] = jnp.zeros((L, 1), jnp.int32)

    # scores = qp @ bank_tile^T (contract feature dim; no materialized .T).
    scores = lax.dot_general(qp_ref[0], bank_ref[0], (((1,), (1,)), ((), ())),
                             preferred_element_type=f32)          # (L, TN) f32

    tile_max = jnp.max(scores, axis=-1, keepdims=True)            # (L, 1)
    tile_arg = jnp.argmax(scores, axis=-1, keepdims=True)         # (L, 1) int32
    glob_arg = tile_arg + n * TN                                   # global index

    # Strict '>' keeps the first global occurrence (matches jnp.argmax).
    better = tile_max > best_s[...]
    best_idx[...] = jnp.where(better, glob_arg, best_idx[...])
    best_s[...] = jnp.maximum(tile_max, best_s[...])

    @pl.when(n == n_last)
    def _finalize():
        idx_ref[0] = best_idx[...]


# ----------------------------------------------------------------------------
# Kernel 2: kv projection of retrieved rows + merged-head SDPA + output proj.
# ----------------------------------------------------------------------------
def knn_attend_kernel(qp_ref, rows_ref, wkvT_ref, wcT_ref, o_ref, kv_sc,
                      *, n_head: int):
    """grid = (bsz, L // TQ).

    qp_ref   : (1, TQ, D)  f32   projected queries for this query tile
    rows_ref : (1, L, D)   bf16  retrieved bank rows (constant along q axis)
    wkvT_ref : (D, 2*dh)   bf16
    wcT_ref  : (D, D)      bf16
    o_ref    : (1, TQ, D)
    kv_sc    : (L, 2*dh)   f32   scratch: K|V of retrieved memories
    """
    f32, bf16 = jnp.float32, jnp.bfloat16
    _, TQ, D = qp_ref.shape
    L = rows_ref.shape[1]
    dh = D // n_head
    scale = 1.0 / math.sqrt(dh)

    # K|V table computed once per batch element (qi == 0), reused by all q-tiles.
    @pl.when(pl.program_id(1) == 0)
    def _project_kv():
        kv_sc[...] = jnp.dot(rows_ref[0], wkvT_ref[...],
                             preferred_element_type=f32)           # (L, 2*dh)

    kv = kv_sc[...]
    k_b = kv[:, :dh].astype(bf16)                                  # (L, dh)
    v_b = kv[:, dh:].astype(bf16)                                  # (L, dh)

    # Fold 1/sqrt(dh) into q; merge heads along M so the whole tile runs as a
    # single score matmul + one PV matmul.  At production dh == 128 the slices
    # are lane-tile aligned so these concats are cheap (they run once per tile).
    # TODO(synk): swap for a layout-aware pltpu.einshape once the lane-splitting
    #             reshape path is verified on all target chips.
    qp_att = qp_ref[0] * scale                                     # (TQ, D) f32
    qh = jnp.concatenate(
        [qp_att[:, h * dh:(h + 1) * dh] for h in range(n_head)],
        axis=0).astype(bf16)                                       # (H*TQ, dh)

    s = lax.dot_general(qh, k_b, (((1,), (1,)), ((), ())),
                        preferred_element_type=f32)                # (H*TQ, L)
    s = s - jnp.max(s, axis=-1, keepdims=True)
    p = jnp.exp(s)
    p = p / jnp.sum(p, axis=-1, keepdims=True)    # exact reciprocal (f32 softmax)
    oh = jnp.dot(p.astype(bf16), v_b, preferred_element_type=f32)  # (H*TQ, dh)

    oh2 = jnp.concatenate(
        [oh[h * TQ:(h + 1) * TQ, :] for h in range(n_head)], axis=1)   # (TQ, D)
    out = jnp.dot(oh2.astype(bf16), wcT_ref[...],
                  preferred_element_type=f32)                      # (TQ, D)
    o_ref[0] = out.astype(o_ref.dtype)


# ----------------------------------------------------------------------------
# Wrapper
# ----------------------------------------------------------------------------
def _vmem_limit(buffer_bytes, slack=8 << 20, cap=32 << 20):
    """Resident-sized scoped-VMEM limit, capped so it is safe on every chip."""
    return int(min(cap, buffer_bytes + slack))


def knn_attention(q, bank, wq, wkv, wc, n_head, *, bank_tile=512, q_tile=256):
    bsz, L, D = q.shape
    N = bank.shape[1]
    dh = D // n_head
    bank_tile = min(bank_tile, N)
    q_tile = min(q_tile, L)
    assert N % bank_tile == 0, "n_bank must be divisible by bank_tile"
    assert L % q_tile == 0, "seqlen must be divisible by q_tile"
    n_tiles = N // bank_tile
    n_qtiles = L // q_tile

    bf16, f32 = jnp.bfloat16, jnp.float32

    # nn.Linear weights (out, in): transpose once, store bf16 (grid-invariant).
    wqT = wq.T.astype(bf16)        # (D, D)
    wkvT = wkv.T.astype(bf16)      # (D, 2*dh)
    wcT = wc.T.astype(bf16)        # (D, D)

    # Perf item 1: the bank (dominant HBM traffic) is stored/streamed in bf16.
    bank_bf = bank.astype(bf16)    # (bsz, N, D)

    # Perf item 4: q projection hoisted out of the bank-streaming kernel.
    qp = jnp.einsum('bld,de->ble', q.astype(bf16), wqT,
                    preferred_element_type=f32)                    # (bsz, L, D) f32
    qp_bf = qp.astype(bf16)

    # ---- phase 1: streamed top-1 search -----------------------------------
    k1_resident = (2 * L * D * 2            # qp bf16, double-buffered
                   + 2 * bank_tile * D * 2  # bank tile bf16, double-buffered
                   + 2 * L * 4              # idx output
                   + L * 8)                 # scratch
    idx = pl.pallas_call(
        knn_search_kernel,
        out_shape=jax.ShapeDtypeStruct((bsz, L, 1), jnp.int32),
        grid=(bsz, n_tiles),
        in_specs=[
            pl.BlockSpec((1, L, D), lambda b, n: (b, 0, 0)),
            pl.BlockSpec((1, bank_tile, D), lambda b, n: (b, n, 0)),
        ],
        out_specs=pl.BlockSpec((1, L, 1), lambda b, n: (b, 0, 0)),
        scratch_shapes=[
            pltpu.VMEM((L, 1), jnp.float32),       # running best score
            pltpu.VMEM((L, 1), jnp.int32),         # running best global index
        ],
        compiler_params=pltpu.CompilerParams(
            dimension_semantics=("parallel", "arbitrary"),
            vmem_limit_bytes=_vmem_limit(k1_resident)),
        cost_estimate=pl.CostEstimate(
            flops=2 * bsz * L * N * D,
            transcendentals=0,
            bytes_accessed=2 * bsz * (N * D + L * D) + 4 * bsz * L),
    )(qp_bf, bank_bf)                                              # (bsz, L, 1)

    # Data-dependent row gather of the exact top-1 neighbours, done by XLA
    # between the two kernels (see TODO at top about fusing it as a DMA gather).
    rows = jnp.take_along_axis(bank_bf, idx, axis=1)               # (bsz, L, D) bf16

    # ---- phase 2: kv projection + attention + output projection -----------
    k2_resident = (2 * q_tile * D * 4        # qp f32 tile
                   + 2 * L * D * 2           # retrieved rows bf16
                   + 2 * (D * 2 * dh + D * D) * 2   # weights bf16
                   + 2 * q_tile * D * 4      # output tile
                   + L * 2 * dh * 4)         # kv scratch
    out = pl.pallas_call(
        functools.partial(knn_attend_kernel, n_head=n_head),
        out_shape=jax.ShapeDtypeStruct((bsz, L, D), q.dtype),
        grid=(bsz, n_qtiles),
        in_specs=[
            pl.BlockSpec((1, q_tile, D), lambda b, i: (b, i, 0)),
            pl.BlockSpec((1, L, D), lambda b, i: (b, 0, 0)),
            pl.BlockSpec((D, 2 * dh), lambda b, i: (0, 0)),
            pl.BlockSpec((D, D), lambda b, i: (0, 0)),
        ],
        out_specs=pl.BlockSpec((1, q_tile, D), lambda b, i: (b, i, 0)),
        scratch_shapes=[pltpu.VMEM((L, 2 * dh), jnp.float32)],
        compiler_params=pltpu.CompilerParams(
            dimension_semantics=("parallel", "arbitrary"),
            vmem_limit_bytes=_vmem_limit(k2_resident)),
        cost_estimate=pl.CostEstimate(
            flops=2 * bsz * (L * D * 2 * dh + 2 * n_head * L * L * dh + L * D * D),
            transcendentals=bsz * n_head * L * L,
            bytes_accessed=bsz * (4 * L * D + 2 * L * D + 4 * L * D)
                           + 2 * (D * 2 * dh + D * D)),
    )(qp, rows, wkvT, wcT)
    return out


# ----------------------------------------------------------------------------
# Pure-JAX reference mirroring the kernel's bf16-MXU / f32-accum path.
# ----------------------------------------------------------------------------
def knn_attention_reference(q, bank, wq, wkv, wc, n_head):
    bsz, L, D = q.shape
    dh = D // n_head
    f32, bf = jnp.float32, jnp.bfloat16
    b16 = lambda x: x.astype(bf)

    qp = jnp.einsum('bld,ed->ble', b16(q), b16(wq),
                    preferred_element_type=f32)                        # (b,L,D)
    scores = jnp.einsum('bld,bnd->bln', b16(qp), b16(bank),
                        preferred_element_type=f32)                    # (b,L,N)
    idx = jnp.argmax(scores, axis=-1)                                  # (b,L)
    rows = jnp.take_along_axis(b16(bank), idx[..., None], axis=1)      # (b,L,D)
    kv = jnp.einsum('bld,ed->ble', rows, b16(wkv),
                    preferred_element_type=f32)                        # (b,L,2dh)
    k, v = kv[..., :dh], kv[..., dh:]
    qh = (qp / math.sqrt(dh)).reshape(bsz, L, n_head, dh).transpose(0, 2, 1, 3)
    s = jnp.einsum('bhld,bmd->bhlm', b16(qh), b16(k), preferred_element_type=f32)
    p = jax.nn.softmax(s, axis=-1)
    o = jnp.einsum('bhlm,bmd->bhld', b16(p), b16(v), preferred_element_type=f32)
    o = o.transpose(0, 2, 1, 3).reshape(bsz, L, D)
    return jnp.einsum('bld,ed->ble', b16(o), b16(wc), preferred_element_type=f32)


if __name__ == "__main__":
    bsz, seqlen, d_model, n_head, n_bank = 2, 8, 32, 4, 256
    dh = d_model // n_head

    key = jax.random.PRNGKey(0)
    k1, k2, k3, k4, k5 = jax.random.split(key, 5)

    # nn.Linear weights: (out_features, in_features), no bias.
    wq = jax.random.normal(k1, (d_model, d_model), jnp.float32) * 0.1
    wkv = jax.random.normal(k2, (2 * dh, d_model), jnp.float32) * 0.1
    wc = jax.random.normal(k3, (d_model, d_model), jnp.float32) * 0.1

    # Input hidden states + per-batch memory bank (stand-in for faiss index data).
    q_in = jax.random.normal(k4, (bsz, seqlen, d_model), jnp.float32)
    bank = jax.random.uniform(k5, (bsz, n_bank, d_model), jnp.float32)

    # bank_tile=128 -> 2 bank tiles, exercising the online top-1 merge path.
    out = knn_attention(q_in, bank, wq, wkv, wc, n_head,
                        bank_tile=128, q_tile=seqlen)
    out = jax.block_until_ready(out)

    ref = knn_attention_reference(q_in, bank, wq, wkv, wc, n_head)
    assert out.shape == (bsz, seqlen, d_model)
    # bf16 MXU operands -> compare at bf16-appropriate tolerance.
    assert jnp.allclose(out, ref, rtol=2e-2, atol=2e-2), "mismatch vs reference"

    print("KERNEL_OK")
</pallas_src>

<mosaic_0001>
module attributes {stable_mosaic.version = 11 : i64} {
  func.func @knn_search_kernel(%arg0: i32, %arg1: i32, %arg2: memref<1x8x32xbf16, #tpu.memory_space<vmem>>, %arg3: memref<1x128x32xbf16, #tpu.memory_space<vmem>>, %arg4: memref<1x8x1xi32, #tpu.memory_space<vmem>>, %arg5: memref<8x1xf32, #tpu.memory_space<vmem>>, %arg6: memref<8x1xi32, #tpu.memory_space<vmem>>) attributes {dimension_semantics = [#tpu.dimension_semantics<parallel>, #tpu.dimension_semantics<arbitrary>], iteration_bounds = array<i64: 2, 2>, scalar_prefetch = 0 : i64, scratch_operands = 2 : i64, tpu.core_type = #tpu.core_type<tc>, window_params = [{transform_indices = @transform_0, window_bounds = array<i64: 1, 8, 32>}, {transform_indices = @transform_1, window_bounds = array<i64: 1, 128, 32>}, {transform_indices = @transform_2, window_bounds = array<i64: 1, 8, 1>}]} {
    %c0_i32 = arith.constant 0 : i32
    %0 = arith.cmpi eq, %arg1, %c0_i32 : i32
    %1 = arith.extui %0 : i1 to i32
    %c0_i32_0 = arith.constant 0 : i32
    %2 = arith.cmpi ne, %1, %c0_i32_0 : i32
    scf.if %2 {
      %cst_18 = arith.constant 0xFF800000 : f32
      %26 = vector.broadcast %cst_18 : f32 to vector<8x1xf32>
      %c0_19 = arith.constant 0 : index
      %c0_20 = arith.constant 0 : index
      %27 = vector.load %arg5[%c0_19, %c0_20] : memref<8x1xf32, #tpu.memory_space<vmem>>, vector<8x1xf32>
      tpu.vector_store %arg5[%c0_19, %c0_20], %26 {strides = array<i32>} : memref<8x1xf32, #tpu.memory_space<vmem>>, vector<8x1xf32>,
      %c0_i32_21 = arith.constant 0 : i32
      %28 = vector.broadcast %c0_i32_21 : i32 to vector<8x1xi32>
      %c0_22 = arith.constant 0 : index
      %c0_23 = arith.constant 0 : index
      %29 = vector.load %arg6[%c0_22, %c0_23] : memref<8x1xi32, #tpu.memory_space<vmem>>, vector<8x1xi32>
      tpu.vector_store %arg6[%c0_22, %c0_23], %28 {strides = array<i32>} : memref<8x1xi32, #tpu.memory_space<vmem>>, vector<8x1xi32>,
    } else {
    }
    %c0 = arith.constant 0 : index
    %c0_1 = arith.constant 0 : index
    %c0_2 = arith.constant 0 : index
    %3 = vector.load %arg2[%c0, %c0_1, %c0_2] : memref<1x8x32xbf16, #tpu.memory_space<vmem>>, vector<1x8x32xbf16>
    %4 = vector.shape_cast %3 : vector<1x8x32xbf16> to vector<8x32xbf16>
    %c0_3 = arith.constant 0 : index
    %c0_4 = arith.constant 0 : index
    %c0_5 = arith.constant 0 : index
    %5 = vector.load %arg3[%c0_3, %c0_4, %c0_5] : memref<1x128x32xbf16, #tpu.memory_space<vmem>>, vector<1x128x32xbf16>
    %6 = vector.shape_cast %5 : vector<1x128x32xbf16> to vector<128x32xbf16>
    %cst = arith.constant dense<0.000000e+00> : vector<8x128xf32>
    %7 = tpu.matmul %4, %6, %cst {dimension_numbers = #tpu.dot_dimension_numbers<[1], [1], [0], [0], [0, 0, 1, 0], [], []>} : vector<8x32xbf16>, vector<128x32xbf16>, vector<8x128xf32> -> vector<8x128xf32>
    %cst_6 = arith.constant dense<0xFF800000> : vector<8xf32>
    %8 = vector.multi_reduction <maximumf>, %7, %cst_6 [1] : vector<8x128xf32> to vector<8xf32>
    %9 = vector.shape_cast %8 : vector<8xf32> to vector<8x1xf32>
    %10 = tpu.reduce_index %7 {axis = 1 : i32, kind = #tpu.reduction_kind<arg_max>} : vector<8x128xf32> -> vector<8xi32>
    %11 = vector.shape_cast %10 : vector<8xi32> to vector<8x1xi32>
    %c128_i32 = arith.constant 128 : i32
    %12 = arith.muli %arg1, %c128_i32 : i32
    %13 = vector.broadcast %12 : i32 to vector<8x1xi32>
    %14 = arith.addi %11, %13 : vector<8x1xi32>
    %c0_7 = arith.constant 0 : index
    %c0_8 = arith.constant 0 : index
    %15 = vector.load %arg5[%c0_7, %c0_8] : memref<8x1xf32, #tpu.memory_space<vmem>>, vector<8x1xf32>
    %16 = arith.cmpf ogt, %9, %15 : vector<8x1xf32>
    %c0_9 = arith.constant 0 : index
    %c0_10 = arith.constant 0 : index
    %17 = vector.load %arg6[%c0_9, %c0_10] : memref<8x1xi32, #tpu.memory_space<vmem>>, vector<8x1xi32>
    %18 = arith.select %16, %14, %17 : vector<8x1xi1>, vector<8x1xi32>
    %c0_11 = arith.constant 0 : index
    %c0_12 = arith.constant 0 : index
    %19 = vector.load %arg6[%c0_11, %c0_12] : memref<8x1xi32, #tpu.memory_space<vmem>>, vector<8x1xi32>
    tpu.vector_store %arg6[%c0_11, %c0_12], %18 {strides = array<i32>} : memref<8x1xi32, #tpu.memory_space<vmem>>, vector<8x1xi32>,
    %c0_13 = arith.constant 0 : index
    %c0_14 = arith.constant 0 : index
    %20 = vector.load %arg5[%c0_13, %c0_14] : memref<8x1xf32, #tpu.memory_space<vmem>>, vector<8x1xf32>
    %21 = arith.maximumf %9, %20 : vector<8x1xf32>
    %c0_15 = arith.constant 0 : index
    %c0_16 = arith.constant 0 : index
    %22 = vector.load %arg5[%c0_15, %c0_16] : memref<8x1xf32, #tpu.memory_space<vmem>>, vector<8x1xf32>
    tpu.vector_store %arg5[%c0_15, %c0_16], %21 {strides = array<i32>} : memref<8x1xf32, #tpu.memory_space<vmem>>, vector<8x1xf32>,
    %c1_i32 = arith.constant 1 : i32
    %23 = arith.cmpi eq, %arg1, %c1_i32 : i32
    %24 = arith.extui %23 : i1 to i32
    %c0_i32_17 = arith.constant 0 : i32
    %25 = arith.cmpi ne, %24, %c0_i32_17 : i32
    scf.if %25 {
      %c0_18 = arith.constant 0 : index
      %c0_19 = arith.constant 0 : index
      %26 = vector.load %arg6[%c0_18, %c0_19] : memref<8x1xi32, #tpu.memory_space<vmem>>, vector<8x1xi32>
      %c0_20 = arith.constant 0 : index
      %c0_21 = arith.constant 0 : index
      %c0_22 = arith.constant 0 : index
      %27 = vector.load %arg4[%c0_20, %c0_21, %c0_22] : memref<1x8x1xi32, #tpu.memory_space<vmem>>, vector<1x8x1xi32>
      %28 = vector.shape_cast %27 : vector<1x8x1xi32> to vector<8x1xi32>
      %29 = vector.shape_cast %26 : vector<8x1xi32> to vector<1x8x1xi32>
      tpu.vector_store %arg4[%c0_20, %c0_21, %c0_22], %29 {strides = array<i32>} : memref<1x8x1xi32, #tpu.memory_space<vmem>>, vector<1x8x1xi32>,
    } else {
    }
    return
  }
  func.func @transform_0(%arg0: i32, %arg1: i32) -> (i32, i32, i32) {
    %c0_i32 = arith.constant 0 : i32
    %c0_i32_0 = arith.constant 0 : i32
    %c0_i32_1 = arith.constant 0 : i32
    return %arg0, %c0_i32, %c0_i32_0 : i32, i32, i32
  }
  func.func @transform_1(%arg0: i32, %arg1: i32) -> (i32, i32, i32) {
    %c0_i32 = arith.constant 0 : i32
    %c0_i32_0 = arith.constant 0 : i32
    return %arg0, %arg1, %c0_i32 : i32, i32, i32
  }
  func.func @transform_2(%arg0: i32, %arg1: i32) -> (i32, i32, i32) {
    %c0_i32 = arith.constant 0 : i32
    %c0_i32_0 = arith.constant 0 : i32
    %c0_i32_1 = arith.constant 0 : i32
    return %arg0, %c0_i32, %c0_i32_0 : i32, i32, i32
  }
}

</mosaic_0001>

<llo_original>
// kernel: tpu_custom_call.1
$region0: #{tpu_custom_call.1}
  #allocation0 [shape = 'u32[]', space=smem, size = 0x4, offset = 0x4, fixed_abs, tag = 'smem constant byte address 0x4 - core index']
  #allocation1 [shape = 'u32[144,128]{1,0:T(1,128)}', space=vmem, size = 0x12000, scoped, tag = 'internal scratch']
  #allocation2 [shape = 'f32[8,1]{1,0:T(8,128)}', space=vmem, size = 0x1000, scoped, tag = 'scratch operand']
  #allocation3 [shape = 's32[8,1]{1,0:T(8,128)}', space=vmem, size = 0x1000, scoped, tag = 'scratch operand']
  %s0 = inlined_call_operand.vmem [shape: bf16[2,8,32], index: 0, kind: input, shape index: {}]
  %s1 = inlined_call_operand.vmem [shape: bf16[2,256,32], index: 1, kind: input, shape index: {}]
  %s2 = inlined_call_operand.vmem [shape: s32[2,8,1], index: 2, kind: output, shape index: {}]
  %s3 = sld [smem:[#allocation0]]
  $region49: #{tpu_custom_call.1} parent=0
    _
  %s5 = ssub.s32 1, %s3
  %s6 = scalar_select 0, %s5, %s3
  loop: start=0, step=1, limit=6
  $region2: #{tpu_custom_call.1} parent=0 // loop_pre_header
    _
  $region3: #{tpu_custom_call.1} parent=0 // loop_header
    %s8 = sphi 0, %s12
    %p9 = scmp.ge.s32.totalorder %s8, 6
    %s15 = sphi 0, %s27
    %s16 = sphi 0, %s23
    %s17 = sphi 0, %s15
    %s18 = sphi 0, %s16
    %s19 = sphi 0, %s17
    %s20 = sphi 0, %s18
    %s30 = sphi 0, %s32
    %s33 = sphi 0, %s30
    %s34 = sphi 0, %s33
    %s50 = sphi 0, %s34
    %s58 = sphi 0, %s60
    %s61 = sphi 0, %s58
    %s62 = sphi 0, %s61
    %s78 = sphi 0, %s62
    %s84 = sphi 0, %s86
    %s87 = sphi 0, %s84
    %s88 = sphi 0, %s87
    %s104 = sphi 0, %s88
  $region4: #{tpu_custom_call.1} parent=0 // loop_header_branch
    %11 = sbr.rel (%p9) target = $region8
  $region5: #{tpu_custom_call.1} parent=0 // loop_body
    %s13 = ssub.s32 %s8, 1
    %s14 = ssub.s32 %s8, 2
    %s21 = sadd.s32 1, %s16
    %p22 = scmp.ge.s32.totalorder %s21, 2
    %s23 = scalar_select %p22, 0, %s21
    %s24 = sadd.s32 1, %s15
    %s25 = scalar_select %p22, %s24, %s15
    %p26 = scmp.ge.s32.totalorder %s25, 2
    %s27 = scalar_select %p26, 0, %s25
    %s28 = ssub.s32 %s15, %s27
    %p29 = scmp.eq.s32.totalorder %s28, 0
    %s31 = sadd.s32 %s30, 1
    %s32 = scalar_select %p29, %s30, %s31
    %p35 = pneg %p29
    %p36 = scmp.eq.s32.totalorder %s8, 3
    %p37 = por %p35, %p36
    %p38 = scmp.ne.s32.totalorder %s30, %s33
    %p39 = scmp.eq.s32.totalorder %s8, 0
    %p40 = por %p38, %p39
    %p41 = scmp.ne.s32.totalorder %s30, %s33
    %p42 = scmp.eq.s32.totalorder %s13, 3
    %p43 = por %p41, %p42
    %p44 = scmp.ne.s32.totalorder %s33, %s34
    %p45 = scmp.eq.s32.totalorder %s13, 0
    %p46 = por %p44, %p45
    %p47 = scmp.ne.s32.totalorder %s33, %s34
    %p48 = scmp.eq.s32.totalorder %s14, 3
    %p49 = por %p47, %p48
    %p51 = scmp.ne.s32.totalorder %s34, %s50
    %p52 = scmp.eq.s32.totalorder %s14, 0
    %p53 = por %p51, %p52
    %s54 = ssub.s32 %s15, %s27
    %s55 = ssub.s32 %s16, %s23
    %s56 = sor.u32 %s54, %s55
    %p57 = scmp.eq.s32.totalorder %s56, 0
    %s59 = sadd.s32 %s58, 1
    %s60 = scalar_select %p57, %s58, %s59
    %p63 = pneg %p57
    %p64 = scmp.eq.s32.totalorder %s8, 3
    %p65 = por %p63, %p64
    %p66 = scmp.ne.s32.totalorder %s58, %s61
    %p67 = scmp.eq.s32.totalorder %s8, 0
    %p68 = por %p66, %p67
    %p69 = scmp.ne.s32.totalorder %s58, %s61
    %p70 = scmp.eq.s32.totalorder %s13, 3
    %p71 = por %p69, %p70
    %p72 = scmp.ne.s32.totalorder %s61, %s62
    %p73 = scmp.eq.s32.totalorder %s13, 0
    %p74 = por %p72, %p73
    %p75 = scmp.ne.s32.totalorder %s61, %s62
    %p76 = scmp.eq.s32.totalorder %s14, 3
    %p77 = por %p75, %p76
    %p79 = scmp.ne.s32.totalorder %s62, %s78
    %p80 = scmp.eq.s32.totalorder %s14, 0
    %p81 = por %p79, %p80
    %s82 = ssub.s32 %s15, %s27
    %p83 = scmp.eq.s32.totalorder %s82, 0
    %s85 = sadd.s32 %s84, 1
    %s86 = scalar_select %p83, %s84, %s85
    %p89 = pneg %p83
    %p90 = scmp.eq.s32.totalorder %s8, 3
    %p91 = por %p89, %p90
    %p92 = scmp.ne.s32.totalorder %s84, %s87
    %p93 = scmp.eq.s32.totalorder %s8, 0
    %p94 = por %p92, %p93
    %p95 = scmp.ne.s32.totalorder %s84, %s87
    %p96 = scmp.eq.s32.totalorder %s13, 3
    %p97 = por %p95, %p96
    %p98 = scmp.ne.s32.totalorder %s87, %s88
    %p99 = scmp.eq.s32.totalorder %s13, 0
    %p100 = por %p98, %p99
    %p101 = scmp.ne.s32.totalorder %s87, %s88
    %p102 = scmp.eq.s32.totalorder %s14, 3
    %p103 = por %p101, %p102
    %p105 = scmp.ne.s32.totalorder %s88, %s104
    %p106 = scmp.eq.s32.totalorder %s14, 0
    %p107 = por %p105, %p106
    %p108 = scmp.le.s32.totalorder 1, %s8
    %p109 = scmp.lt.s32.totalorder %s8, 5
    %p110 = pnand %p108, %p109
    %p111 = pneg %p110
    // Predicated region
    $region9: #{tpu_custom_call.1} parent=5 // pred_check
      _
    $region10: #{tpu_custom_call.1} parent=5 // pred_check_branch
      %113 = sbr.rel (%p110) target = $region12
    $region11: #{tpu_custom_call.1} parent=5 // pred_region
      %s114 = ssub.s32 %s8, 1
    $region12: #{tpu_custom_call.1} parent=5 // pred_fallthru
      _
    %p115 = scmp.lt.s32.totalorder %s8, 4
    // Predicated region
    $region13: #{tpu_custom_call.1} parent=5 // pred_check
      %p116 = pneg %p115
    $region14: #{tpu_custom_call.1} parent=5 // pred_check_branch
      %118 = sbr.rel (%p116) target = $region16
    $region15: #{tpu_custom_call.1} parent=5 // pred_region
      // Predicated region
      $region17: #{tpu_custom_call.1} parent=15 // pred_check
        %p119 = pneg %p40
      $region18: #{tpu_custom_call.1} parent=15 // pred_check_branch
        %121 = sbr.rel (%p119) target = $region20
      $region19: #{tpu_custom_call.1} parent=15 // pred_region
        %p122 = scmp.lt.s32.totalorder %s15, 1
        %s123 = scalar_select %p122, %s15, 1
        %s124 = smul.addr %s123, 4
        %s125 = scalar_lea.vmem %s0, %s124
      $region20: #{tpu_custom_call.1} parent=15 // pred_fallthru
        _
      // Predicated region
      $region21: #{tpu_custom_call.1} parent=15 // pred_check
        %p126 = pneg %p68
      $region22: #{tpu_custom_call.1} parent=15 // pred_check_branch
        %128 = sbr.rel (%p126) target = $region24
      $region23: #{tpu_custom_call.1} parent=15 // pred_region
        %s129 = smul.u32 16, %s16
        %p130 = scmp.lt.s32.totalorder %s15, 1
        %s131 = scalar_select %p130, %s15, 1
        %p132 = scmp.lt.s32.totalorder %s129, 31
        %s133 = scalar_select %p132, %s129, 31
        %s134 = smul.addr %s131, 32
        %s135 = sadd.s32 %s133, %s134
        %s136 = smul.addr %s135, 4
        %s137 = scalar_lea.vmem %s1, %s136
        %s138 = smul.u32 16, %s16
      $region24: #{tpu_custom_call.1} parent=15 // pred_fallthru
        _
    $region16: #{tpu_custom_call.1} parent=5 // pred_fallthru
      _
    %p139 = scmp.le.s32.totalorder 1, %s8
    %p140 = scmp.lt.s32.totalorder %s8, 5
    %p141 = pnand %p139, %p140
    %p142 = pneg %p141
    // Predicated region
    $region25: #{tpu_custom_call.1} parent=5 // pred_check
      _
    $region26: #{tpu_custom_call.1} parent=5 // pred_check_branch
      %144 = sbr.rel (%p141) target = $region28
    $region27: #{tpu_custom_call.1} parent=5 // pred_region
      %s145 = ssub.s32 %s8, 1
      %p146 = scmp.lt.s32.totalorder %s17, 1
      %s147 = scalar_select %p146, %s17, 1
      %s148 = smul.addr %s147, 4
      %s149 = scalar_lea.vmem %s0, %s148
      %p150 = pneg %p46
      %p151 = pneg %p43
      %s152 = smul.u32 16, %s18
      %p153 = scmp.lt.s32.totalorder %s17, 1
      %s154 = scalar_select %p153, %s17, 1
      %p155 = scmp.lt.s32.totalorder %s152, 31
      %s156 = scalar_select %p155, %s152, 31
      %s157 = smul.addr %s154, 32
      %s158 = sadd.s32 %s156, %s157
      %s159 = smul.addr %s158, 4
      %s160 = scalar_lea.vmem %s1, %s159
      %p161 = pneg %p74
      %p162 = pneg %p71
      %p163 = pneg %p100
      %p164 = pneg %p97
      %p165 = scmp.lt.s32.totalorder %s17, 1
      %s166 = scalar_select %p165, %s17, 1
      %s167 = smul.addr %s166, 8
      %s168 = scalar_lea.vmem %s2, %s167
      %p169 = scmp.lt.s32.totalorder %s17, 1
      %s170 = scalar_select %p169, %s17, 1
      %s171 = smul.addr %s170, 4
      %s172 = scalar_lea.vmem %s0, %s171
      %s173 = smul.u32 16, %s18
      %p174 = scmp.lt.s32.totalorder %s17, 1
      %s175 = scalar_select %p174, %s17, 1
      %p176 = scmp.lt.s32.totalorder %s173, 31
      %s177 = scalar_select %p176, %s173, 31
      %s178 = smul.addr %s175, 32
      %s179 = sadd.s32 %s177, %s178
      %s180 = smul.addr %s179, 4
      %s181 = scalar_lea.vmem %s1, %s180
      %s182 = smul.u32 16, %s18
      %p183 = scmp.lt.s32.totalorder %s17, 1
      %s184 = scalar_select %p183, %s17, 1
      %s185 = smul.addr %s184, 8
      %s186 = scalar_lea.vmem %s2, %s185
      %p188 = scmp.eq.s32.totalorder %s18, 0
      // Predicated region
      $region29: #{tpu_custom_call.1} parent=27 // pred_check
        %p189 = pneg %p188
      $region30: #{tpu_custom_call.1} parent=27 // pred_check_branch
        %191 = sbr.rel (%p189) target = $region32
      $region31: #{tpu_custom_call.1} parent=27 // pred_region
        %vm192 = vcmask 7168
        %193 = vst.msk [vmem:[#allocation2] sm:$0xff] %vm192, -inf
        %194 = vst.msk [vmem:[#allocation3] sm:$0xff] %vm192, 0
      $region32: #{tpu_custom_call.1} parent=27 // pred_fallthru
        _
      %v195 = vld [vmem:[%s172] sm:$0xf]
      %v196 = vld [vmem:[%s181] sm:$0xf]
      %v197 = vld [vmem:[%s181 + $0x4] sm:$0xf]
      %v198 = vld [vmem:[%s181 + $0x8] sm:$0xf]
      %v199 = vld [vmem:[%s181 + $0xc] sm:$0xf]
      %v200 = vld [vmem:[%s181 + $0x10] sm:$0xf]
      %v201 = vld [vmem:[%s181 + $0x14] sm:$0xf]
      %v202 = vld [vmem:[%s181 + $0x18] sm:$0xf]
      %v203 = vld [vmem:[%s181 + $0x1c] sm:$0xf]
      %v204 = vld [vmem:[%s181 + $0x20] sm:$0xf]
      %v205 = vld [vmem:[%s181 + $0x24] sm:$0xf]
      %v206 = vld [vmem:[%s181 + $0x28] sm:$0xf]
      %v207 = vld [vmem:[%s181 + $0x2c] sm:$0xf]
      %v208 = vld [vmem:[%s181 + $0x30] sm:$0xf]
      %v209 = vld [vmem:[%s181 + $0x34] sm:$0xf]
      %v210 = vld [vmem:[%s181 + $0x38] sm:$0xf]
      %v211 = vld [vmem:[%s181 + $0x3c] sm:$0xf]
      %v228 = vunpack.c.l.b16 %v196
      %v229 = vunpack.c.l.b16 %v197
      %v230 = vunpack.c.l.b16 %v198
      %v231 = vunpack.c.l.b16 %v199
      %v232 = vunpack.c.l.b16 %v200
      %v233 = vunpack.c.l.b16 %v201
      %v234 = vunpack.c.l.b16 %v202
      %v235 = vunpack.c.l.b16 %v203
      %v236 = vunpack.c.l.b16 %v204
      %v237 = vunpack.c.l.b16 %v205
      %v238 = vunpack.c.l.b16 %v206
      %v239 = vunpack.c.l.b16 %v207
      %v240 = vunpack.c.l.b16 %v208
      %v241 = vunpack.c.l.b16 %v209
      %v242 = vunpack.c.l.b16 %v210
      %v243 = vunpack.c.l.b16 %v211
      %v244 = vpack.c.b16 %v229, %v228
      %v245 = vpack.c.b16 %v231, %v230
      %v246 = vpack.c.b16 %v233, %v232
      %v247 = vpack.c.b16 %v235, %v234
      %v248 = vpack.c.b16 %v237, %v236
      %v249 = vpack.c.b16 %v239, %v238
      %v250 = vpack.c.b16 %v241, %v240
      %v251 = vpack.c.b16 %v243, %v242
      %vm252 = vcmask 261120
      %v254 = vsel %vm252, %v195, 0
      %v257 = vsel %vm252, %v244, 0
      %v260 = vsel %vm252, %v245, 0
      %v263 = vsel %vm252, %v246, 0
      %v266 = vsel %vm252, %v247, 0
      %v269 = vsel %vm252, %v248, 0
      %v272 = vsel %vm252, %v249, 0
      %v275 = vsel %vm252, %v250, 0
      %v278 = vsel %vm252, %v251, 0
      %280 = vmatprep.subr.bf16.mxu0 0
      %281 = vmatpush1.bf16.xpose.msra.mxu0 %v257
      %282 = vmatprep.subr.bf16.mxu0 0
      %283 = vmatpush1.bf16.xpose.msra.mxu0 %v260
      %284 = vmatprep.subr.bf16.mxu0 0
      %285 = vmatpush1.bf16.xpose.msra.mxu0 %v263
      %286 = vmatprep.subr.bf16.mxu0 0
      %287 = vmatpush1.bf16.xpose.msra.mxu0 %v266
      %288 = vmatprep.subr.bf16.mxu0 0
      %289 = vmatpush1.bf16.xpose.msra.mxu0 %v269
      %290 = vmatprep.subr.bf16.mxu0 0
      %291 = vmatpush1.bf16.xpose.msra.mxu0 %v272
      %292 = vmatprep.subr.bf16.mxu0 0
      %293 = vmatpush1.bf16.xpose.msra.mxu0 %v275
      %294 = vmatprep.subr.bf16.mxu0 0
      %295 = vmatpush1.bf16.xpose.msra.mxu0 %v278
      %296 = vmatprep.subr.bf16.mxu0 0
      %297 = vmatpush1.bf16.xpose.msra.mxu0 0
      %298 = vmatprep.subr.bf16.mxu0 0
      %299 = vmatpush1.bf16.xpose.msra.mxu0 0
      %300 = vmatprep.subr.bf16.mxu0 0
      %301 = vmatpush1.bf16.xpose.msra.mxu0 0
      %302 = vmatprep.subr.bf16.mxu0 0
      %303 = vmatpush1.bf16.xpose.msra.mxu0 0
      %304 = vmatprep.subr.bf16.mxu0 0
      %305 = vmatpush1.bf16.xpose.msra.mxu0 0
      %306 = vmatprep.subr.bf16.mxu0 0
      %307 = vmatpush1.bf16.xpose.msra.mxu0 0
      %308 = vmatprep.subr.bf16.mxu0 0
      %309 = vmatpush1.bf16.xpose.msra.mxu0 0
      %310 = vmatprep.subr.bf16.mxu0 0
      %311 = vmatpush1.bf16.xpose.msra.mxu0 0
      %312 = vmatprep.mubr.bf16.mxu0 0
      %313 = vmatmul.mubr.bf16.gmra.mrb[0].mxu0 %v254
      %v314 = vpop.f32.mrb[0].mxu0
      %v315 = vadd.f32 0.0, %v314
      %v316 = vpop.f32.mrb[0].mxu0
      %v317 = vpop.f32.mrb[0].mxu0
      %v318 = vpop.f32.mrb[0].mxu0
      %319 = vdwg.mxu0
      %320 = vmax.xlane.f32.xlu0 %v315
      %v321 = vpop.xlane.xlu0 %320
      %322 = vmax.index.xlane.f32.xlu0 %v315
      %v323 = vpop.xlane.xlu0 %322
      %s324 = smul.u32 %s18, 128
      %v325 = vstv %s324
      %v326 = vadd.s32 %v323, %v325
      %v327 = vld [vmem:[#allocation2] sm:$0xff]
      %vm328 = vcmp.gt.f32.partialorder %v321, %v327
      %v329 = vld [vmem:[#allocation3] sm:$0xff]
      %v330 = vsel %vm328, %v326, %v329
      %vm331 = vcmask 7168
      %332 = vst.msk [vmem:[#allocation3] sm:$0xff] %vm331, %v330
      %v333 = vld [vmem:[#allocation2] sm:$0xff]
      %v334 = vmax.f32 %v321, %v333
      %335 = vst.msk [vmem:[#allocation2] sm:$0xff] %vm331, %v334
      %p336 = scmp.eq.s32.totalorder %s18, 1
      // Predicated region
      $region33: #{tpu_custom_call.1} parent=27 // pred_check
        %p337 = pneg %p336
      $region34: #{tpu_custom_call.1} parent=27 // pred_check_branch
        %339 = sbr.rel (%p337) target = $region36
      $region35: #{tpu_custom_call.1} parent=27 // pred_region
        %v340 = vld [vmem:[#allocation3] sm:$0xff]
        %341 = vst.msk [vmem:[%s186] sm:$0xff] %vm331, %v340
      $region36: #{tpu_custom_call.1} parent=27 // pred_fallthru
        _
      %p342 = scmp.lt.s32.totalorder %s17, 1
      %s343 = scalar_select %p342, %s17, 1
      %s344 = smul.addr %s343, 8
      %s345 = scalar_lea.vmem %s2, %s344
      // Predicated region
      $region37: #{tpu_custom_call.1} parent=27 // pred_check
        %p346 = pneg %p97
      $region38: #{tpu_custom_call.1} parent=27 // pred_check_branch
        %348 = sbr.rel (%p346) target = $region40
      $region39: #{tpu_custom_call.1} parent=27 // pred_region
        _
      $region40: #{tpu_custom_call.1} parent=27 // pred_fallthru
        _
    $region28: #{tpu_custom_call.1} parent=5 // pred_fallthru
      _
    %p349 = scmp.le.s32.totalorder 2, %s8
    // Predicated region
    $region41: #{tpu_custom_call.1} parent=5 // pred_check
      %p350 = pneg %p349
    $region42: #{tpu_custom_call.1} parent=5 // pred_check_branch
      %352 = sbr.rel (%p350) target = $region44
    $region43: #{tpu_custom_call.1} parent=5 // pred_region
      %s353 = ssub.s32 %s8, 2
      // Predicated region
      $region45: #{tpu_custom_call.1} parent=43 // pred_check
        %p354 = pneg %p103
      $region46: #{tpu_custom_call.1} parent=43 // pred_check_branch
        %356 = sbr.rel (%p354) target = $region48
      $region47: #{tpu_custom_call.1} parent=43 // pred_region
        %p357 = scmp.lt.s32.totalorder %s19, 1
        %s358 = scalar_select %p357, %s19, 1
        %s359 = smul.addr %s358, 8
        %s360 = scalar_lea.vmem %s2, %s359
      $region48: #{tpu_custom_call.1} parent=43 // pred_fallthru
        _
    $region44: #{tpu_custom_call.1} parent=5 // pred_fallthru
      _
  $region6: #{tpu_custom_call.1} parent=0 // loop_footer
    %s12 = sadd.s32 1, %s8
  $region7: #{tpu_custom_call.1} parent=0 // loop_footer_branch
    %7 = sbr.rel target = $region3
  $region8: #{tpu_custom_call.1} parent=0 // loop_exit
    _

</llo_original>
